<compile_context>
chip_gen: v7x
topology: tpu7x:2x2x1
jax: 0.10.0
libtpu: 0.0.40
codegen_flags: <defaults>
</compile_context>

<pallas_src>
import functools

import jax
import jax.numpy as jnp
from jax.experimental import pallas as pl
from jax.experimental.pallas import tpu as pltpu


def _tubelet_proj_kernel(x_ref, w_ref, b_ref, o_ref):
    """One M-tile of:  O[tm, N] = X[tm, K] @ W[K, N] + bias[1, N]."""
    o_ref[...] = (
        jnp.dot(x_ref[...], w_ref[...], preferred_element_type=jnp.float32)
        + b_ref[...]
    ).astype(o_ref.dtype)


def _round_up(x, m):
    return ((x + m - 1) // m) * m


def _vmem_budget_bytes():
    """~70% of on-chip VMEM, capped at 96 MiB.

    v7x (64 MiB physical) -> ~45 MiB; v5e/v6e (128 MiB) -> ~90 MiB.
    """
    try:
        cap = pltpu.get_tpu_info().vmem_capacity_bytes
    except Exception:  # conservative fallback if the query is unavailable
        cap = 64 * 1024 * 1024
    return min(int(cap * 0.7), 96 * 1024 * 1024)


def _pick_tm(M, K, N, budget_bytes, *, quantum=256, min_tile=16, tm_max=4096):
    """Pick the M-tile: as large as the VMEM budget allows, 256-aligned, but
    capped at ~ceil(M/2) so the "parallel" grid axis has >= 2 steps
    (keeps both TensorCores busy on v7x).  Never below 16 (bf16 packing)."""
    if M <= 2 * min_tile:
        return M                                      # too small to split
    if M <= quantum:
        return min(M, _round_up(pl.cdiv(M, 2), min_tile))

    def est(t):
        x_bytes = 2 * t * K * 2            # bf16 X tile, double-buffered
        o_bytes = 2 * t * N * 4            # f32 out tile, double-buffered
        w_bytes = K * N * 2 + N * 4        # resident W (bf16) + bias (f32)
        return x_bytes + o_bytes + w_bytes

    tm = min(tm_max, _round_up(pl.cdiv(M, 2), quantum))
    while tm > quantum and est(tm) > budget_bytes:
        tm -= quantum
    return tm


def _tubelet_proj(patches, w_mat, bias):
    """patches: (M, K) bf16, w_mat: (K, N) bf16, bias: (1, N) f32 -> (M, N) f32.

    Grid over M only; K and N are single full-extent blocks (W and bias stay
    resident in VMEM).  The output is written unpadded: N == embed_dim is the
    full last dim, so the block is legal even for N < 128 (masked stores, but
    4x fewer HBM write bytes than padding to 128 for D=32, and no wrapper
    slice pass afterwards).
    """
    M, K = patches.shape
    Kw, N = w_mat.shape
    assert Kw == K and bias.shape == (1, N)

    budget = _vmem_budget_bytes()
    tm = _pick_tm(M, K, N, budget)
    grid = (pl.cdiv(M, tm),)

    cost = pl.CostEstimate(
        flops=2 * M * K * N,
        transcendentals=0,
        bytes_accessed=M * K * 2 + K * N * 2 + N * 4 + M * N * 4,
    )

    return pl.pallas_call(
        _tubelet_proj_kernel,
        out_shape=jax.ShapeDtypeStruct((M, N), jnp.float32),
        grid=grid,
        in_specs=[
            pl.BlockSpec((tm, K), lambda i: (i, 0)),   # X: streamed over M
            pl.BlockSpec((K, N), lambda i: (0, 0)),    # W: fully resident
            pl.BlockSpec((1, N), lambda i: (0, 0)),    # bias: fully resident
        ],
        out_specs=pl.BlockSpec((tm, N), lambda i: (i, 0)),
        compiler_params=pltpu.CompilerParams(
            dimension_semantics=("parallel",),
            vmem_limit_bytes=budget,
        ),
        cost_estimate=cost,
    )(patches, w_mat, bias)


class TubeletEmbedPallas:
    """JAX/Pallas port of TubeletEmbed.

    Conv3d(in_chans, embed_dim, kernel=stride=(early_stride, ps, ps))
    followed by flatten(2).transpose(1, 2).
    """

    def __init__(self, img_size=16, early_stride=4, patch_size=8,
                 in_chans=3, embed_dim=32, key=None):
        self.img_size = (img_size, img_size)
        self.patch_size = (patch_size, patch_size)
        self.early_stride = early_stride
        self.in_chans = in_chans
        self.embed_dim = embed_dim
        self.num_patches = (img_size // patch_size) * (img_size // patch_size)

        if key is None:
            key = jax.random.PRNGKey(0)
        kw, kb = jax.random.split(key)
        # Conv3d weight: (D, C, kT, kH, kW); bias: (D,)
        self.weight = (
            jax.random.normal(
                kw,
                (embed_dim, in_chans, early_stride, patch_size, patch_size),
                dtype=jnp.float32,
            )
            * 0.02
        )
        self.bias = jax.random.normal(kb, (embed_dim,), dtype=jnp.float32) * 0.02

    @functools.partial(jax.jit, static_argnums=0)
    def __call__(self, x):
        B, C, T, H, W = x.shape
        ps_h, ps_w = self.patch_size
        es = self.early_stride
        D = self.embed_dim
        assert T == es and H == self.img_size[0] and W == self.img_size[1], (
            f"Input image size ({T}*{H}*{W}) doesn't match model "
            f"({es}*{self.img_size[0]}*{self.img_size[1]})."
        )
        nph, npw = H // ps_h, W // ps_w
        num_patches = nph * npw
        K = C * es * ps_h * ps_w

        # im2col glue in bf16.  Under this jit the bf16 convert and the 7-D
        # transpose fuse into a single XLA copy fusion (one 4B-read/2B-write
        # pass over the video).  Flatten order (c, t, ph, pw) matches the
        # Conv3d weight layout; patch order (h_patch, w_patch) row-major
        # matches flatten(2) of the NCDHW conv output.
        patches = x.astype(jnp.bfloat16)
        patches = patches.reshape(B, C, es, nph, ps_h, npw, ps_w)
        patches = patches.transpose(0, 3, 5, 1, 2, 4, 6)  # B,nph,npw,C,T,ph,pw
        patches = patches.reshape(B * num_patches, K)

        # Weight (D, C, kT, kH, kW) -> (K, D) bf16; bias -> (1, D) f32.
        w_mat = self.weight.reshape(D, K).T.astype(jnp.bfloat16)
        b_mat = self.bias.astype(jnp.float32).reshape(1, D)

        out = _tubelet_proj(patches, w_mat, b_mat)   # (M, D) f32, unpadded
        return out.reshape(B, num_patches, D)


def _reference(x, weight, bias, patch_size, early_stride):
    """Pure-JAX reference: strided 3D conv via lax.conv_general_dilated."""
    y = jax.lax.conv_general_dilated(
        x.astype(jnp.float32),
        weight.astype(jnp.float32),
        window_strides=(early_stride, patch_size, patch_size),
        padding="VALID",
        dimension_numbers=("NCDHW", "OIDHW", "NCDHW"),
    )
    y = y + bias.reshape(1, -1, 1, 1, 1)
    B, D = y.shape[0], y.shape[1]
    y = y.reshape(B, D, -1)              # flatten(2)
    return jnp.transpose(y, (0, 2, 1))   # transpose(1, 2)


if __name__ == "__main__":
    # Small shapes consistent with the module:
    #   B=2, in_chans=3, T=early_stride=4, H=W=img_size=16, patch_size=8,
    #   embed_dim=32 -> num_patches=4, K = 3*4*8*8 = 768, M = 8.
    key = jax.random.PRNGKey(0)
    k_x, k_params = jax.random.split(key)

    B, C, T, H, W = 2, 3, 4, 16, 16
    x = jax.random.normal(k_x, (B, C, T, H, W), dtype=jnp.float32)

    model = TubeletEmbedPallas(
        img_size=16, early_stride=4, patch_size=8,
        in_chans=3, embed_dim=32, key=k_params,
    )

    out = jax.block_until_ready(model(x))
    assert out.shape == (B, model.num_patches, model.embed_dim), out.shape

    # Tight check: reference fed the same bf16-rounded operands, so only f32
    # accumulation order differs from the kernel.
    x_r = x.astype(jnp.bfloat16).astype(jnp.float32)
    w_r = model.weight.astype(jnp.bfloat16).astype(jnp.float32)
    ref_tight = jax.block_until_ready(
        _reference(x_r, w_r, model.bias, patch_size=8, early_stride=4))
    assert jnp.allclose(out, ref_tight, atol=1e-3, rtol=1e-3), (
        float(jnp.max(jnp.abs(out - ref_tight))))

    # Loose check vs full-f32 conv reference (bf16 operand rounding only).
    ref_f32 = jax.block_until_ready(
        _reference(x, model.weight, model.bias, patch_size=8, early_stride=4))
    assert jnp.allclose(out, ref_f32, atol=5e-2, rtol=5e-2), (
        float(jnp.max(jnp.abs(out - ref_f32))))

    print("KERNEL_OK")
</pallas_src>

<mosaic_0001>
module attributes {stable_mosaic.version = 11 : i64} {
  func.func @_tubelet_proj_kernel(%arg0: i32, %arg1: memref<8x768xbf16, #tpu.memory_space<vmem>>, %arg2: memref<768x32xbf16, #tpu.memory_space<vmem>>, %arg3: memref<1x32xf32, #tpu.memory_space<vmem>>, %arg4: memref<8x32xf32, #tpu.memory_space<vmem>>) attributes {dimension_semantics = [#tpu.dimension_semantics<parallel>], iteration_bounds = array<i64: 1>, scalar_prefetch = 0 : i64, scratch_operands = 0 : i64, tpu.core_type = #tpu.core_type<tc>, window_params = [{transform_indices = @transform_0, window_bounds = array<i64: 8, 768>}, {pipeline_mode = #tpu.pipeline_mode<synchronous>, transform_indices = @transform_1, window_bounds = array<i64: 768, 32>}, {pipeline_mode = #tpu.pipeline_mode<synchronous>, transform_indices = @transform_2, window_bounds = array<i64: 1, 32>}, {transform_indices = @transform_3, window_bounds = array<i64: 8, 32>}]} {
    %c0 = arith.constant 0 : index
    %c0_0 = arith.constant 0 : index
    %0 = vector.load %arg1[%c0, %c0_0] : memref<8x768xbf16, #tpu.memory_space<vmem>>, vector<8x768xbf16>
    %c0_1 = arith.constant 0 : index
    %c0_2 = arith.constant 0 : index
    %1 = vector.load %arg2[%c0_1, %c0_2] : memref<768x32xbf16, #tpu.memory_space<vmem>>, vector<768x32xbf16>
    %cst = arith.constant dense<0.000000e+00> : vector<8x32xf32>
    %2 = tpu.matmul %0, %1, %cst {dimension_numbers = #tpu.dot_dimension_numbers<[1], [0], [0], [1], [0, 0, 1, 1], [], []>} : vector<8x768xbf16>, vector<768x32xbf16>, vector<8x32xf32> -> vector<8x32xf32>
    %c0_3 = arith.constant 0 : index
    %c0_4 = arith.constant 0 : index
    %3 = vector.load %arg3[%c0_3, %c0_4] : memref<1x32xf32, #tpu.memory_space<vmem>>, vector<1x32xf32>
    %4 = vector.broadcast %3 : vector<1x32xf32> to vector<8x32xf32>
    %5 = arith.addf %2, %4 : vector<8x32xf32>
    %c0_5 = arith.constant 0 : index
    %c0_6 = arith.constant 0 : index
    %6 = vector.load %arg4[%c0_5, %c0_6] : memref<8x32xf32, #tpu.memory_space<vmem>>, vector<8x32xf32>
    tpu.vector_store %arg4[%c0_5, %c0_6], %5 {strides = array<i32>} : memref<8x32xf32, #tpu.memory_space<vmem>>, vector<8x32xf32>,
    return
  }
  func.func @transform_0(%arg0: i32) -> (i32, i32) {
    %c0_i32 = arith.constant 0 : i32
    %c0_i32_0 = arith.constant 0 : i32
    return %arg0, %c0_i32 : i32, i32
  }
  func.func @transform_1(%arg0: i32) -> (i32, i32) {
    %c0_i32 = arith.constant 0 : i32
    %c0_i32_0 = arith.constant 0 : i32
    %c0_i32_1 = arith.constant 0 : i32
    return %c0_i32, %c0_i32_0 : i32, i32
  }
  func.func @transform_2(%arg0: i32) -> (i32, i32) {
    %c0_i32 = arith.constant 0 : i32
    %c0_i32_0 = arith.constant 0 : i32
    %c0_i32_1 = arith.constant 0 : i32
    return %c0_i32, %c0_i32_0 : i32, i32
  }
  func.func @transform_3(%arg0: i32) -> (i32, i32) {
    %c0_i32 = arith.constant 0 : i32
    %c0_i32_0 = arith.constant 0 : i32
    return %arg0, %c0_i32 : i32, i32
  }
}

</mosaic_0001>

<llo_original>
// kernel: a_call__.1
$region0: #{a_call__.1}
  #allocation0 [shape = 'u32[]', space=smem, size = 0x4, offset = 0x4, fixed_abs, tag = 'smem constant byte address 0x4 - core index']
  #allocation1 [shape = 'u32[144,128]{1,0:T(1,128)}', space=vmem, size = 0x12000, scoped, tag = 'internal scratch']
  %s0 = inlined_call_operand.vmem [shape: bf16[8,768], index: 0, kind: input, shape index: {}]
  %s1 = inlined_call_operand.vmem [shape: bf16[768,32], index: 1, kind: input, shape index: {}]
  %s2 = inlined_call_operand.vmem [shape: f32[1,32], index: 2, kind: input, shape index: {}]
  %s3 = inlined_call_operand.hbm [shape: f32[8,32], index: 3, kind: output, shape index: {}]
  %s4 = sld [smem:[#allocation0]]
  $region22: #{a_call__.1} parent=0
    _
  %s6 = ssub.s32 1, %s4
  %s7 = scalar_select 0, %s6, %s4
  $region1: #{a_call__.1} parent=0
    #allocation2 [shape = 'u8[4096]{0}', space=vmem, size = 0x1000, scoped, tag = 'output window, operand 0, single buffered']
    #allocation3 [shape = 's32[1]{0}', space=sflag, size = 0x4, scoped, tag = 'scoped memory for a_call__.1']
    %8 = vsyncpa [#allocation3], 0
    // Predicated region
    $region2: #{a_call__.1} parent=1 // pred_check
      _
    $region3: #{a_call__.1} parent=1 // pred_check_branch
      %10 = sbr.rel (0) target = $region5
    $region4: #{a_call__.1} parent=1 // pred_region
      _
    $region5: #{a_call__.1} parent=1 // pred_fallthru
      _
    // Predicated region
    $region6: #{a_call__.1} parent=1 // pred_check
      _
    $region7: #{a_call__.1} parent=1 // pred_check_branch
      %12 = sbr.rel (0) target = $region9
    $region8: #{a_call__.1} parent=1 // pred_region
      _
    $region9: #{a_call__.1} parent=1 // pred_fallthru
      _
    // Predicated region
    $region10: #{a_call__.1} parent=1 // pred_check
      _
    $region11: #{a_call__.1} parent=1 // pred_check_branch
      %14 = sbr.rel (0) target = $region13
    $region12: #{a_call__.1} parent=1 // pred_region
      _
    $region13: #{a_call__.1} parent=1 // pred_fallthru
      _
    %v16 = vld [vmem:[%s0] sm:$0xff]
    %v17 = vld [vmem:[%s0 + $0x8] sm:$0xff]
    %v18 = vld [vmem:[%s0 + $0x10] sm:$0xff]
    %v19 = vld [vmem:[%s1] sm:$0xf]
    %v20 = vld [vmem:[%s1 + $0x4] sm:$0xf]
    %v21 = vld [vmem:[%s1 + $0x8] sm:$0xf]
    %v22 = vld [vmem:[%s1 + $0xc] sm:$0xf]
    %v23 = vld [vmem:[%s1 + $0x10] sm:$0xf]
    %v24 = vld [vmem:[%s1 + $0x14] sm:$0xf]
    %v25 = vld [vmem:[%s1 + $0x18] sm:$0xf]
    %v26 = vld [vmem:[%s1 + $0x1c] sm:$0xf]
    %v27 = vld [vmem:[%s1 + $0x20] sm:$0xf]
    %v28 = vld [vmem:[%s1 + $0x24] sm:$0xf]
    %v29 = vld [vmem:[%s1 + $0x28] sm:$0xf]
    %v30 = vld [vmem:[%s1 + $0x2c] sm:$0xf]
    %v31 = vld [vmem:[%s1 + $0x30] sm:$0xf]
    %v32 = vld [vmem:[%s1 + $0x34] sm:$0xf]
    %v33 = vld [vmem:[%s1 + $0x38] sm:$0xf]
    %v34 = vld [vmem:[%s1 + $0x3c] sm:$0xf]
    %v35 = vld [vmem:[%s1 + $0x40] sm:$0xf]
    %v36 = vld [vmem:[%s1 + $0x44] sm:$0xf]
    %v37 = vld [vmem:[%s1 + $0x48] sm:$0xf]
    %v38 = vld [vmem:[%s1 + $0x4c] sm:$0xf]
    %v39 = vld [vmem:[%s1 + $0x50] sm:$0xf]
    %v40 = vld [vmem:[%s1 + $0x54] sm:$0xf]
    %v41 = vld [vmem:[%s1 + $0x58] sm:$0xf]
    %v42 = vld [vmem:[%s1 + $0x5c] sm:$0xf]
    %v43 = vld [vmem:[%s1 + $0x60] sm:$0xf]
    %v44 = vld [vmem:[%s1 + $0x64] sm:$0xf]
    %v45 = vld [vmem:[%s1 + $0x68] sm:$0xf]
    %v46 = vld [vmem:[%s1 + $0x6c] sm:$0xf]
    %v47 = vld [vmem:[%s1 + $0x70] sm:$0xf]
    %v48 = vld [vmem:[%s1 + $0x74] sm:$0xf]
    %v49 = vld [vmem:[%s1 + $0x78] sm:$0xf]
    %v50 = vld [vmem:[%s1 + $0x7c] sm:$0xf]
    %v51 = vld [vmem:[%s1 + $0x80] sm:$0xf]
    %v52 = vld [vmem:[%s1 + $0x84] sm:$0xf]
    %v53 = vld [vmem:[%s1 + $0x88] sm:$0xf]
    %v54 = vld [vmem:[%s1 + $0x8c] sm:$0xf]
    %v55 = vld [vmem:[%s1 + $0x90] sm:$0xf]
    %v56 = vld [vmem:[%s1 + $0x94] sm:$0xf]
    %v57 = vld [vmem:[%s1 + $0x98] sm:$0xf]
    %v58 = vld [vmem:[%s1 + $0x9c] sm:$0xf]
    %v59 = vld [vmem:[%s1 + $0xa0] sm:$0xf]
    %v60 = vld [vmem:[%s1 + $0xa4] sm:$0xf]
    %v61 = vld [vmem:[%s1 + $0xa8] sm:$0xf]
    %v62 = vld [vmem:[%s1 + $0xac] sm:$0xf]
    %v63 = vld [vmem:[%s1 + $0xb0] sm:$0xf]
    %v64 = vld [vmem:[%s1 + $0xb4] sm:$0xf]
    %v65 = vld [vmem:[%s1 + $0xb8] sm:$0xf]
    %v66 = vld [vmem:[%s1 + $0xbc] sm:$0xf]
    %v67 = vld [vmem:[%s1 + $0xc0] sm:$0xf]
    %v68 = vld [vmem:[%s1 + $0xc4] sm:$0xf]
    %v69 = vld [vmem:[%s1 + $0xc8] sm:$0xf]
    %v70 = vld [vmem:[%s1 + $0xcc] sm:$0xf]
    %v71 = vld [vmem:[%s1 + $0xd0] sm:$0xf]
    %v72 = vld [vmem:[%s1 + $0xd4] sm:$0xf]
    %v73 = vld [vmem:[%s1 + $0xd8] sm:$0xf]
    %v74 = vld [vmem:[%s1 + $0xdc] sm:$0xf]
    %v75 = vld [vmem:[%s1 + $0xe0] sm:$0xf]
    %v76 = vld [vmem:[%s1 + $0xe4] sm:$0xf]
    %v77 = vld [vmem:[%s1 + $0xe8] sm:$0xf]
    %v78 = vld [vmem:[%s1 + $0xec] sm:$0xf]
    %v79 = vld [vmem:[%s1 + $0xf0] sm:$0xf]
    %v80 = vld [vmem:[%s1 + $0xf4] sm:$0xf]
    %v81 = vld [vmem:[%s1 + $0xf8] sm:$0xf]
    %v82 = vld [vmem:[%s1 + $0xfc] sm:$0xf]
    %v83 = vld [vmem:[%s1 + $0x100] sm:$0xf]
    %v84 = vld [vmem:[%s1 + $0x104] sm:$0xf]
    %v85 = vld [vmem:[%s1 + $0x108] sm:$0xf]
    %v86 = vld [vmem:[%s1 + $0x10c] sm:$0xf]
    %v87 = vld [vmem:[%s1 + $0x110] sm:$0xf]
    %v88 = vld [vmem:[%s1 + $0x114] sm:$0xf]
    %v89 = vld [vmem:[%s1 + $0x118] sm:$0xf]
    %v90 = vld [vmem:[%s1 + $0x11c] sm:$0xf]
    %v91 = vld [vmem:[%s1 + $0x120] sm:$0xf]
    %v92 = vld [vmem:[%s1 + $0x124] sm:$0xf]
    %v93 = vld [vmem:[%s1 + $0x128] sm:$0xf]
    %v94 = vld [vmem:[%s1 + $0x12c] sm:$0xf]
    %v95 = vld [vmem:[%s1 + $0x130] sm:$0xf]
    %v96 = vld [vmem:[%s1 + $0x134] sm:$0xf]
    %v97 = vld [vmem:[%s1 + $0x138] sm:$0xf]
    %v98 = vld [vmem:[%s1 + $0x13c] sm:$0xf]
    %v99 = vld [vmem:[%s1 + $0x140] sm:$0xf]
    %v100 = vld [vmem:[%s1 + $0x144] sm:$0xf]
    %v101 = vld [vmem:[%s1 + $0x148] sm:$0xf]
    %v102 = vld [vmem:[%s1 + $0x14c] sm:$0xf]
    %v103 = vld [vmem:[%s1 + $0x150] sm:$0xf]
    %v104 = vld [vmem:[%s1 + $0x154] sm:$0xf]
    %v105 = vld [vmem:[%s1 + $0x158] sm:$0xf]
    %v106 = vld [vmem:[%s1 + $0x15c] sm:$0xf]
    %v107 = vld [vmem:[%s1 + $0x160] sm:$0xf]
    %v108 = vld [vmem:[%s1 + $0x164] sm:$0xf]
    %v109 = vld [vmem:[%s1 + $0x168] sm:$0xf]
    %v110 = vld [vmem:[%s1 + $0x16c] sm:$0xf]
    %v111 = vld [vmem:[%s1 + $0x170] sm:$0xf]
    %v112 = vld [vmem:[%s1 + $0x174] sm:$0xf]
    %v113 = vld [vmem:[%s1 + $0x178] sm:$0xf]
    %v114 = vld [vmem:[%s1 + $0x17c] sm:$0xf]
    %v115 = vld [vmem:[%s2] sm:$0x1]
    %v117 = vlaneseq
    %v118 = vshrl.u32 %v117, 7
    %v119 = vsub.s32 0, %v118
    %v120 = vrot.slane %v115, %v119
    %v125 = vunpack.c.l.b16 %v16
    %v126 = vunpack.c.h.b16 %v16
    %v127 = vunpack.c.l.b16 %v17
    %v128 = vunpack.c.h.b16 %v17
    %v129 = vunpack.c.l.b16 %v18
    %v130 = vunpack.c.h.b16 %v18
    %v131 = vpack.c.b16 %v125, %v125
    %v132 = vpack.c.b16 %v126, %v126
    %v133 = vpack.c.b16 %v127, %v127
    %v134 = vpack.c.b16 %v128, %v128
    %v135 = vpack.c.b16 %v129, %v129
    %v136 = vpack.c.b16 %v130, %v130
    %v239 = vunpack.c.l.b16 %v19
    %v240 = vunpack.c.l.b16 %v20
    %v241 = vunpack.c.l.b16 %v21
    %v242 = vunpack.c.l.b16 %v22
    %v243 = vunpack.c.l.b16 %v23
    %v244 = vunpack.c.l.b16 %v24
    %v245 = vunpack.c.l.b16 %v25
    %v246 = vunpack.c.l.b16 %v26
    %v247 = vunpack.c.l.b16 %v27
    %v248 = vunpack.c.l.b16 %v28
    %v249 = vunpack.c.l.b16 %v29
    %v250 = vunpack.c.l.b16 %v30
    %v251 = vunpack.c.l.b16 %v31
    %v252 = vunpack.c.l.b16 %v32
    %v253 = vunpack.c.l.b16 %v33
    %v254 = vunpack.c.l.b16 %v34
    %v255 = vunpack.c.l.b16 %v35
    %v256 = vunpack.c.l.b16 %v36
    %v257 = vunpack.c.l.b16 %v37
    %v258 = vunpack.c.l.b16 %v38
    %v259 = vunpack.c.l.b16 %v39
    %v260 = vunpack.c.l.b16 %v40
    %v261 = vunpack.c.l.b16 %v41
    %v262 = vunpack.c.l.b16 %v42
    %v263 = vunpack.c.l.b16 %v43
    %v264 = vunpack.c.l.b16 %v44
    %v265 = vunpack.c.l.b16 %v45
    %v266 = vunpack.c.l.b16 %v46
    %v267 = vunpack.c.l.b16 %v47
    %v268 = vunpack.c.l.b16 %v48
    %v269 = vunpack.c.l.b16 %v49
    %v270 = vunpack.c.l.b16 %v50
    %v271 = vunpack.c.l.b16 %v51
    %v272 = vunpack.c.l.b16 %v52
    %v273 = vunpack.c.l.b16 %v53
    %v274 = vunpack.c.l.b16 %v54
    %v275 = vunpack.c.l.b16 %v55
    %v276 = vunpack.c.l.b16 %v56
    %v277 = vunpack.c.l.b16 %v57
    %v278 = vunpack.c.l.b16 %v58
    %v279 = vunpack.c.l.b16 %v59
    %v280 = vunpack.c.l.b16 %v60
    %v281 = vunpack.c.l.b16 %v61
    %v282 = vunpack.c.l.b16 %v62
    %v283 = vunpack.c.l.b16 %v63
    %v284 = vunpack.c.l.b16 %v64
    %v285 = vunpack.c.l.b16 %v65
    %v286 = vunpack.c.l.b16 %v66
    %v287 = vunpack.c.l.b16 %v67
    %v288 = vunpack.c.l.b16 %v68
    %v289 = vunpack.c.l.b16 %v69
    %v290 = vunpack.c.l.b16 %v70
    %v291 = vunpack.c.l.b16 %v71
    %v292 = vunpack.c.l.b16 %v72
    %v293 = vunpack.c.l.b16 %v73
    %v294 = vunpack.c.l.b16 %v74
    %v295 = vunpack.c.l.b16 %v75
    %v296 = vunpack.c.l.b16 %v76
    %v297 = vunpack.c.l.b16 %v77
    %v298 = vunpack.c.l.b16 %v78
    %v299 = vunpack.c.l.b16 %v79
    %v300 = vunpack.c.l.b16 %v80
    %v301 = vunpack.c.l.b16 %v81
    %v302 = vunpack.c.l.b16 %v82
    %v303 = vunpack.c.l.b16 %v83
    %v304 = vunpack.c.l.b16 %v84
    %v305 = vunpack.c.l.b16 %v85
    %v306 = vunpack.c.l.b16 %v86
    %v307 = vunpack.c.l.b16 %v87
    %v308 = vunpack.c.l.b16 %v88
    %v309 = vunpack.c.l.b16 %v89
    %v310 = vunpack.c.l.b16 %v90
    %v311 = vunpack.c.l.b16 %v91
    %v312 = vunpack.c.l.b16 %v92
    %v313 = vunpack.c.l.b16 %v93
    %v314 = vunpack.c.l.b16 %v94
    %v315 = vunpack.c.l.b16 %v95
    %v316 = vunpack.c.l.b16 %v96
    %v317 = vunpack.c.l.b16 %v97
    %v318 = vunpack.c.l.b16 %v98
    %v319 = vunpack.c.l.b16 %v99
    %v320 = vunpack.c.l.b16 %v100
    %v321 = vunpack.c.l.b16 %v101
    %v322 = vunpack.c.l.b16 %v102
    %v323 = vunpack.c.l.b16 %v103
    %v324 = vunpack.c.l.b16 %v104
    %v325 = vunpack.c.l.b16 %v105
    %v326 = vunpack.c.l.b16 %v106
    %v327 = vunpack.c.l.b16 %v107
    %v328 = vunpack.c.l.b16 %v108
    %v329 = vunpack.c.l.b16 %v109
    %v330 = vunpack.c.l.b16 %v110
    %v331 = vunpack.c.l.b16 %v111
    %v332 = vunpack.c.l.b16 %v112
    %v333 = vunpack.c.l.b16 %v113
    %v334 = vunpack.c.l.b16 %v114
    %v335 = vpack.c.b16 %v240, %v239
    %v336 = vpack.c.b16 %v242, %v241
    %v337 = vpack.c.b16 %v244, %v243
    %v338 = vpack.c.b16 %v246, %v245
    %v339 = vpack.c.b16 %v248, %v247
    %v340 = vpack.c.b16 %v250, %v249
    %v341 = vpack.c.b16 %v252, %v251
    %v342 = vpack.c.b16 %v254, %v253
    %v343 = vpack.c.b16 %v256, %v255
    %v344 = vpack.c.b16 %v258, %v257
    %v345 = vpack.c.b16 %v260, %v259
    %v346 = vpack.c.b16 %v262, %v261
    %v347 = vpack.c.b16 %v264, %v263
    %v348 = vpack.c.b16 %v266, %v265
    %v349 = vpack.c.b16 %v268, %v267
    %v350 = vpack.c.b16 %v270, %v269
    %v351 = vpack.c.b16 %v272, %v271
    %v352 = vpack.c.b16 %v274, %v273
    %v353 = vpack.c.b16 %v276, %v275
    %v354 = vpack.c.b16 %v278, %v277
    %v355 = vpack.c.b16 %v280, %v279
    %v356 = vpack.c.b16 %v282, %v281
    %v357 = vpack.c.b16 %v284, %v283
    %v358 = vpack.c.b16 %v286, %v285
    %v359 = vpack.c.b16 %v288, %v287
    %v360 = vpack.c.b16 %v290, %v289
    %v361 = vpack.c.b16 %v292, %v291
    %v362 = vpack.c.b16 %v294, %v293
    %v363 = vpack.c.b16 %v296, %v295
    %v364 = vpack.c.b16 %v298, %v297
    %v365 = vpack.c.b16 %v300, %v299
    %v366 = vpack.c.b16 %v302, %v301
    %v367 = vpack.c.b16 %v304, %v303
    %v368 = vpack.c.b16 %v306, %v305
    %v369 = vpack.c.b16 %v308, %v307
    %v370 = vpack.c.b16 %v310, %v309
    %v371 = vpack.c.b16 %v312, %v311
    %v372 = vpack.c.b16 %v314, %v313
    %v373 = vpack.c.b16 %v316, %v315
    %v374 = vpack.c.b16 %v318, %v317
    %v375 = vpack.c.b16 %v320, %v319
    %v376 = vpack.c.b16 %v322, %v321
    %v377 = vpack.c.b16 %v324, %v323
    %v378 = vpack.c.b16 %v326, %v325
    %v379 = vpack.c.b16 %v328, %v327
    %v380 = vpack.c.b16 %v330, %v329
    %v381 = vpack.c.b16 %v332, %v331
    %v382 = vpack.c.b16 %v334, %v333
    %431 = vmatprep.subr.bf16.mxu0 0
    %432 = vmatpush1.bf16.msra.mxu0 %v335
    %433 = vmatprep.subr.bf16.mxu0 0
    %434 = vmatpush1.bf16.msra.mxu0 %v336
    %435 = vmatprep.subr.bf16.mxu0 0
    %436 = vmatpush1.bf16.msra.mxu0 %v337
    %437 = vmatprep.subr.bf16.mxu0 0
    %438 = vmatpush1.bf16.msra.mxu0 %v338
    %439 = vmatprep.subr.bf16.mxu0 0
    %440 = vmatpush1.bf16.msra.mxu0 %v339
    %441 = vmatprep.subr.bf16.mxu0 0
    %442 = vmatpush1.bf16.msra.mxu0 %v340
    %443 = vmatprep.subr.bf16.mxu0 0
    %444 = vmatpush1.bf16.msra.mxu0 %v341
    %445 = vmatprep.subr.bf16.mxu0 0
    %446 = vmatpush1.bf16.msra.mxu0 %v342
    %447 = vmatprep.subr.bf16.mxu0 0
    %448 = vmatpush1.bf16.msra.mxu0 %v343
    %449 = vmatprep.subr.bf16.mxu0 0
    %450 = vmatpush1.bf16.msra.mxu0 %v344
    %451 = vmatprep.subr.bf16.mxu0 0
    %452 = vmatpush1.bf16.msra.mxu0 %v345
    %453 = vmatprep.subr.bf16.mxu0 0
    %454 = vmatpush1.bf16.msra.mxu0 %v346
    %455 = vmatprep.subr.bf16.mxu0 0
    %456 = vmatpush1.bf16.msra.mxu0 %v347
    %457 = vmatprep.subr.bf16.mxu0 0
    %458 = vmatpush1.bf16.msra.mxu0 %v348
    %459 = vmatprep.subr.bf16.mxu0 0
    %460 = vmatpush1.bf16.msra.mxu0 %v349
    %461 = vmatprep.subr.bf16.mxu0 0
    %462 = vmatpush1.bf16.msra.mxu0 %v350
    %463 = vmatprep.mubr.bf16.mxu0 %v132
    %464 = vmatmul.mubr.bf16.gmra.mrb[0].mxu0 %v131
    %v465 = vpop.f32.mrb[0].mxu0
    %v466 = vadd.f32 %v120, %v465
    %v467 = vpop.f32.mrb[0].mxu0
    %v468 = vpop.f32.mrb[0].mxu0
    %v469 = vpop.f32.mrb[0].mxu0
    %470 = vdwg.mxu0
    %471 = vmatprep.subr.bf16.mxu0 0
    %472 = vmatpush1.bf16.msra.mxu0 %v351
    %473 = vmatprep.subr.bf16.mxu0 0
    %474 = vmatpush1.bf16.msra.mxu0 %v352
    %475 = vmatprep.subr.bf16.mxu0 0
    %476 = vmatpush1.bf16.msra.mxu0 %v353
    %477 = vmatprep.subr.bf16.mxu0 0
    %478 = vmatpush1.bf16.msra.mxu0 %v354
    %479 = vmatprep.subr.bf16.mxu0 0
    %480 = vmatpush1.bf16.msra.mxu0 %v355
    %481 = vmatprep.subr.bf16.mxu0 0
    %482 = vmatpush1.bf16.msra.mxu0 %v356
    %483 = vmatprep.subr.bf16.mxu0 0
    %484 = vmatpush1.bf16.msra.mxu0 %v357
    %485 = vmatprep.subr.bf16.mxu0 0
    %486 = vmatpush1.bf16.msra.mxu0 %v358
    %487 = vmatprep.subr.bf16.mxu0 0
    %488 = vmatpush1.bf16.msra.mxu0 %v359
    %489 = vmatprep.subr.bf16.mxu0 0
    %490 = vmatpush1.bf16.msra.mxu0 %v360
    %491 = vmatprep.subr.bf16.mxu0 0
    %492 = vmatpush1.bf16.msra.mxu0 %v361
    %493 = vmatprep.subr.bf16.mxu0 0
    %494 = vmatpush1.bf16.msra.mxu0 %v362
    %495 = vmatprep.subr.bf16.mxu0 0
    %496 = vmatpush1.bf16.msra.mxu0 %v363
    %497 = vmatprep.subr.bf16.mxu0 0
    %498 = vmatpush1.bf16.msra.mxu0 %v364
    %499 = vmatprep.subr.bf16.mxu0 0
    %500 = vmatpush1.bf16.msra.mxu0 %v365
    %501 = vmatprep.subr.bf16.mxu0 0
    %502 = vmatpush1.bf16.msra.mxu0 %v366
    %503 = vmatprep.mubr.bf16.mxu0 %v134
    %504 = vmatmul.mubr.bf16.gmra.mrb[0].mxu0 %v133
    %v505 = vpop.f32.mrb[0].mxu0
    %v506 = vadd.f32 %v466, %v505
    %v507 = vpop.f32.mrb[0].mxu0
    %v508 = vpop.f32.mrb[0].mxu0
    %v509 = vpop.f32.mrb[0].mxu0
    %510 = vdwg.mxu0
    %511 = vmatprep.subr.bf16.mxu0 0
    %512 = vmatpush1.bf16.msra.mxu0 %v367
    %513 = vmatprep.subr.bf16.mxu0 0
    %514 = vmatpush1.bf16.msra.mxu0 %v368
    %515 = vmatprep.subr.bf16.mxu0 0
    %516 = vmatpush1.bf16.msra.mxu0 %v369
    %517 = vmatprep.subr.bf16.mxu0 0
    %518 = vmatpush1.bf16.msra.mxu0 %v370
    %519 = vmatprep.subr.bf16.mxu0 0
    %520 = vmatpush1.bf16.msra.mxu0 %v371
    %521 = vmatprep.subr.bf16.mxu0 0
    %522 = vmatpush1.bf16.msra.mxu0 %v372
    %523 = vmatprep.subr.bf16.mxu0 0
    %524 = vmatpush1.bf16.msra.mxu0 %v373
    %525 = vmatprep.subr.bf16.mxu0 0
    %526 = vmatpush1.bf16.msra.mxu0 %v374
    %527 = vmatprep.subr.bf16.mxu0 0
    %528 = vmatpush1.bf16.msra.mxu0 %v375
    %529 = vmatprep.subr.bf16.mxu0 0
    %530 = vmatpush1.bf16.msra.mxu0 %v376
    %531 = vmatprep.subr.bf16.mxu0 0
    %532 = vmatpush1.bf16.msra.mxu0 %v377
    %533 = vmatprep.subr.bf16.mxu0 0
    %534 = vmatpush1.bf16.msra.mxu0 %v378
    %535 = vmatprep.subr.bf16.mxu0 0
    %536 = vmatpush1.bf16.msra.mxu0 %v379
    %537 = vmatprep.subr.bf16.mxu0 0
    %538 = vmatpush1.bf16.msra.mxu0 %v380
    %539 = vmatprep.subr.bf16.mxu0 0
    %540 = vmatpush1.bf16.msra.mxu0 %v381
    %541 = vmatprep.subr.bf16.mxu0 0
    %542 = vmatpush1.bf16.msra.mxu0 %v382
    %543 = vmatprep.mubr.bf16.mxu0 %v136
    %544 = vmatmul.mubr.bf16.gmra.mrb[0].mxu0 %v135
    %v545 = vpop.f32.mrb[0].mxu0
    %v546 = vadd.f32 %v506, %v545
    %v547 = vpop.f32.mrb[0].mxu0
    %v548 = vpop.f32.mrb[0].mxu0
    %v549 = vpop.f32.mrb[0].mxu0
    %550 = vdwg.mxu0
    %vm551 = vcmask 261120
    %552 = vst.msk [vmem:[#allocation2] sm:$0xff] %vm551, %v546
    // Predicated region
    $region14: #{a_call__.1} parent=1 // pred_check
      _
    $region15: #{a_call__.1} parent=1 // pred_check_branch
      %554 = sbr.rel (0) target = $region17
    $region16: #{a_call__.1} parent=1 // pred_region
      %s556 = ssub.s32 128, 128
      %557 = vsyncadd [#allocation3], %s556
      %s559 = sshll.u32 [#allocation2], 4
      %s560 = int_to_ptr.vmem [resolvable:$true] %s559
      %562 = dma.vmem_to_hbm [thread:$0]  %s560, 128, %s3, [#allocation3]
    $region17: #{a_call__.1} parent=1 // pred_fallthru
      _
    // Predicated region
    $region18: #{a_call__.1} parent=1 // pred_check
      _
    $region19: #{a_call__.1} parent=1 // pred_check_branch
      %564 = sbr.rel (0) target = $region21
    $region20: #{a_call__.1} parent=1 // pred_region
      %565 = dma.done [#allocation3], 128
    $region21: #{a_call__.1} parent=1 // pred_fallthru
      _
    %566 = vsyncpa [#allocation3], 1

</llo_original>
